<compile_context>
chip_gen: v7x
topology: tpu7x:2x2x1
jax: 0.10.0
libtpu: 0.0.40
codegen_flags: <defaults>
</compile_context>

<pallas_src>
import jax
import jax.numpy as jnp
from jax.experimental import pallas as pl
from jax.experimental.pallas import tpu as pltpu

CIN = 3
COUT = 3


def _linear_kernel_t(x_ref, w_ref, b_ref, o_ref):
    # x_ref: (CIN, TL)  f32 in VMEM, batch on lanes
    # w_ref: (COUT, CIN) f32 in SMEM (native nn.Linear layout, no transpose)
    # b_ref: (COUT,)     f32 in SMEM
    # o_ref: (COUT, TL)  f32 in VMEM
    x = x_ref[...]                                     # (CIN, TL)
    x0 = x[0:1, :]
    x1 = x[1:2, :]
    x2 = x[2:3, :]
    rows = []
    for j in range(COUT):                              # 9 lane-dense VPU FMAs
        row = x0 * w_ref[j, 0] + b_ref[j]
        row = row + x1 * w_ref[j, 1]
        row = row + x2 * w_ref[j, 2]
        rows.append(row)
    # Single full-tile, lane-dense store.
    o_ref[...] = jnp.concatenate(rows, axis=0).astype(o_ref.dtype)


def _round_up(x, m):
    return ((x + m - 1) // m) * m


def _select_tl(batch, tl_cap):
    """Pick the lane-tile size (multiple of 128, v7x-safe cap, >=2 grid steps)."""
    tl_cap = max(128, _round_up(tl_cap, 128))
    if batch <= 128:
        # Single block equal to the full lane dim (satisfies the block rule).
        return batch
    if batch <= tl_cap:
        # Split into >=2 parallel grid steps so both v7x TensorCores get work
        # (harmless extra step on single-TC v5e/v6e).
        return min(tl_cap, _round_up(pl.cdiv(batch, 2), 128))
    return tl_cap


def linear_pallas_t(x_t, weight, bias, *, tl_cap=128 * 1024):
    """y_t = (x_t.T @ weight.T + bias).T with batch on the lane axis.

    x_t:    (3, B)  float32   (lane-dense batch)
    weight: (3, 3)  float32   (native PyTorch (out_features, in_features))
    bias:   (3,)    float32
    returns (3, B)  float32
    """
    cin, B = x_t.shape
    cout, cin2 = weight.shape
    assert cin == CIN and cout == COUT and cin2 == CIN

    TL = _select_tl(B, tl_cap)
    grid = (pl.cdiv(B, TL),)

    cost = pl.CostEstimate(
        flops=2 * B * cin * cout + B * cout,
        transcendentals=0,
        bytes_accessed=4 * (B * cin + cout * cin + cout + B * cout),
    )

    # (CIN, TL) / (COUT, TL) f32 blocks pad to 8 sublanes -> 32*TL bytes each;
    # 2 blocks (in + out), double-buffered, plus headroom.
    vmem_limit = min(64 << 20, max(16 << 20, 2 * 2 * 8 * TL * 4 + (2 << 20)))

    return pl.pallas_call(
        _linear_kernel_t,
        out_shape=jax.ShapeDtypeStruct((cout, B), x_t.dtype),
        grid=grid,
        in_specs=[
            pl.BlockSpec((cin, TL), lambda i: (0, i),
                         memory_space=pltpu.MemorySpace.VMEM),
            # Weight / bias: whole tiny arrays in SMEM (scalar reads), constant
            # across the batch grid.
            pl.BlockSpec(memory_space=pltpu.MemorySpace.SMEM),
            pl.BlockSpec(memory_space=pltpu.MemorySpace.SMEM),
        ],
        out_specs=pl.BlockSpec((cout, TL), lambda i: (0, i),
                               memory_space=pltpu.MemorySpace.VMEM),
        compiler_params=pltpu.CompilerParams(
            dimension_semantics=("parallel",),
            vmem_limit_bytes=vmem_limit),
        cost_estimate=cost,
    )(x_t, weight, bias)


def linear_pallas(x, weight, bias, *, tl_cap=128 * 1024,
                  min_pallas_batch=512, force_pallas=False):
    """y = x @ weight.T + bias  (PyTorch nn.Linear(3, 3) semantics).

    x:      (B, 3)  float32
    weight: (3, 3)  float32
    bias:   (3,)    float32
    """
    B, cin = x.shape
    assert cin == CIN and weight.shape == (COUT, CIN) and bias.shape == (COUT,)

    if not force_pallas and B < min_pallas_batch:
        # TODO(synk): tiny batch -- a standalone pallas_call launch dwarfs the
        # ~2*B*9 FLOPs here; let XLA fuse it into the surrounding graph.
        return x @ weight.T + bias

    # Relayout so the batch is on the lane axis.  (Ideally the producer hands
    # over this layout and these transposes vanish.)
    y_t = linear_pallas_t(x.T, weight, bias, tl_cap=tl_cap)
    return y_t.T


if __name__ == "__main__":
    key = jax.random.PRNGKey(0)
    k_x, k_w, k_b, k_x2, k_x3 = jax.random.split(key, 5)

    # Deterministic parameter init (mimic nn.Linear's uniform(-1/sqrt(fan_in)))
    bound = 1.0 / (CIN ** 0.5)
    weight = jax.random.uniform(k_w, (COUT, CIN), jnp.float32, -bound, bound)
    bias = jax.random.uniform(k_b, (COUT,), jnp.float32, -bound, bound)

    # 1) Tiny batch (module-sized input): fallback path, exact nn.Linear math.
    x_small = jax.random.normal(k_x, (8, CIN), jnp.float32)
    y_small = jax.block_until_ready(linear_pallas(x_small, weight, bias))
    assert jnp.allclose(y_small, x_small @ weight.T + bias, atol=1e-5, rtol=1e-5)

    # 2) Pallas path, lane-aligned batch (2 parallel grid steps).
    x_p = jax.random.normal(k_x2, (256, CIN), jnp.float32)
    y_p = jax.block_until_ready(linear_pallas(x_p, weight, bias, force_pallas=True))
    assert jnp.allclose(y_p, x_p @ weight.T + bias, atol=1e-5, rtol=1e-5)

    # 3) Pallas path, ragged last block (B not a multiple of the lane tile).
    x_r = jax.random.normal(k_x3, (261, CIN), jnp.float32)
    y_r = jax.block_until_ready(linear_pallas(x_r, weight, bias, force_pallas=True))
    assert jnp.allclose(y_r, x_r @ weight.T + bias, atol=1e-5, rtol=1e-5)

    print("KERNEL_OK")
</pallas_src>

<mosaic_0001>
module attributes {stable_mosaic.version = 11 : i64} {
  func.func @_linear_kernel_t(%arg0: i32, %arg1: memref<3x128xf32, #tpu.memory_space<vmem>>, %arg2: memref<3x3xf32, #tpu.memory_space<smem>>, %arg3: memref<3xf32, #tpu.memory_space<smem>>, %arg4: memref<3x128xf32, #tpu.memory_space<vmem>>) attributes {dimension_semantics = [#tpu.dimension_semantics<parallel>], iteration_bounds = array<i64: 2>, scalar_prefetch = 0 : i64, scratch_operands = 0 : i64, tpu.core_type = #tpu.core_type<tc>, window_params = [{transform_indices = @transform_0, window_bounds = array<i64: 3, 128>}, {transform_indices = @transform_1, window_bounds = array<i64: 3, 3>}, {transform_indices = @transform_2, window_bounds = array<i64: 3>}, {transform_indices = @transform_3, window_bounds = array<i64: 3, 128>}]} {
    %c0 = arith.constant 0 : index
    %c0_0 = arith.constant 0 : index
    %0 = vector.load %arg1[%c0, %c0_0] : memref<3x128xf32, #tpu.memory_space<vmem>>, vector<3x128xf32>
    %1 = vector.extract_strided_slice %0 {offsets = [0, 0], sizes = [1, 128], strides = [1, 1]} : vector<3x128xf32> to vector<1x128xf32>
    %2 = vector.extract_strided_slice %0 {offsets = [1, 0], sizes = [1, 128], strides = [1, 1]} : vector<3x128xf32> to vector<1x128xf32>
    %3 = vector.extract_strided_slice %0 {offsets = [2, 0], sizes = [1, 128], strides = [1, 1]} : vector<3x128xf32> to vector<1x128xf32>
    %c0_1 = arith.constant 0 : index
    %c0_2 = arith.constant 0 : index
    %4 = memref.load %arg2[%c0_1, %c0_2] : memref<3x3xf32, #tpu.memory_space<smem>>
    %5 = vector.broadcast %4 : f32 to vector<1x128xf32>
    %6 = arith.mulf %1, %5 : vector<1x128xf32>
    %c0_3 = arith.constant 0 : index
    %7 = memref.load %arg3[%c0_3] : memref<3xf32, #tpu.memory_space<smem>>
    %8 = vector.broadcast %7 : f32 to vector<1x128xf32>
    %9 = arith.addf %6, %8 : vector<1x128xf32>
    %c0_4 = arith.constant 0 : index
    %c1 = arith.constant 1 : index
    %10 = memref.load %arg2[%c0_4, %c1] : memref<3x3xf32, #tpu.memory_space<smem>>
    %11 = vector.broadcast %10 : f32 to vector<1x128xf32>
    %12 = arith.mulf %2, %11 : vector<1x128xf32>
    %13 = arith.addf %9, %12 : vector<1x128xf32>
    %c0_5 = arith.constant 0 : index
    %c2 = arith.constant 2 : index
    %14 = memref.load %arg2[%c0_5, %c2] : memref<3x3xf32, #tpu.memory_space<smem>>
    %15 = vector.broadcast %14 : f32 to vector<1x128xf32>
    %16 = arith.mulf %3, %15 : vector<1x128xf32>
    %17 = arith.addf %13, %16 : vector<1x128xf32>
    %c1_6 = arith.constant 1 : index
    %c0_7 = arith.constant 0 : index
    %18 = memref.load %arg2[%c1_6, %c0_7] : memref<3x3xf32, #tpu.memory_space<smem>>
    %19 = vector.broadcast %18 : f32 to vector<1x128xf32>
    %20 = arith.mulf %1, %19 : vector<1x128xf32>
    %c1_8 = arith.constant 1 : index
    %21 = memref.load %arg3[%c1_8] : memref<3xf32, #tpu.memory_space<smem>>
    %22 = vector.broadcast %21 : f32 to vector<1x128xf32>
    %23 = arith.addf %20, %22 : vector<1x128xf32>
    %c1_9 = arith.constant 1 : index
    %c1_10 = arith.constant 1 : index
    %24 = memref.load %arg2[%c1_9, %c1_10] : memref<3x3xf32, #tpu.memory_space<smem>>
    %25 = vector.broadcast %24 : f32 to vector<1x128xf32>
    %26 = arith.mulf %2, %25 : vector<1x128xf32>
    %27 = arith.addf %23, %26 : vector<1x128xf32>
    %c1_11 = arith.constant 1 : index
    %c2_12 = arith.constant 2 : index
    %28 = memref.load %arg2[%c1_11, %c2_12] : memref<3x3xf32, #tpu.memory_space<smem>>
    %29 = vector.broadcast %28 : f32 to vector<1x128xf32>
    %30 = arith.mulf %3, %29 : vector<1x128xf32>
    %31 = arith.addf %27, %30 : vector<1x128xf32>
    %c2_13 = arith.constant 2 : index
    %c0_14 = arith.constant 0 : index
    %32 = memref.load %arg2[%c2_13, %c0_14] : memref<3x3xf32, #tpu.memory_space<smem>>
    %33 = vector.broadcast %32 : f32 to vector<1x128xf32>
    %34 = arith.mulf %1, %33 : vector<1x128xf32>
    %c2_15 = arith.constant 2 : index
    %35 = memref.load %arg3[%c2_15] : memref<3xf32, #tpu.memory_space<smem>>
    %36 = vector.broadcast %35 : f32 to vector<1x128xf32>
    %37 = arith.addf %34, %36 : vector<1x128xf32>
    %c2_16 = arith.constant 2 : index
    %c1_17 = arith.constant 1 : index
    %38 = memref.load %arg2[%c2_16, %c1_17] : memref<3x3xf32, #tpu.memory_space<smem>>
    %39 = vector.broadcast %38 : f32 to vector<1x128xf32>
    %40 = arith.mulf %2, %39 : vector<1x128xf32>
    %41 = arith.addf %37, %40 : vector<1x128xf32>
    %c2_18 = arith.constant 2 : index
    %c2_19 = arith.constant 2 : index
    %42 = memref.load %arg2[%c2_18, %c2_19] : memref<3x3xf32, #tpu.memory_space<smem>>
    %43 = vector.broadcast %42 : f32 to vector<1x128xf32>
    %44 = arith.mulf %3, %43 : vector<1x128xf32>
    %45 = arith.addf %41, %44 : vector<1x128xf32>
    %46 = tpu.concatenate %17, %31, %45 in 0 : vector<1x128xf32>, vector<1x128xf32>, vector<1x128xf32> -> vector<3x128xf32>
    %c0_20 = arith.constant 0 : index
    %c0_21 = arith.constant 0 : index
    %47 = vector.load %arg4[%c0_20, %c0_21] : memref<3x128xf32, #tpu.memory_space<vmem>>, vector<3x128xf32>
    tpu.vector_store %arg4[%c0_20, %c0_21], %46 {strides = array<i32>} : memref<3x128xf32, #tpu.memory_space<vmem>>, vector<3x128xf32>,
    return
  }
  func.func @transform_0(%arg0: i32) -> (i32, i32) {
    %c0_i32 = arith.constant 0 : i32
    %c0_i32_0 = arith.constant 0 : i32
    return %c0_i32, %arg0 : i32, i32
  }
  func.func @transform_1(%arg0: i32) -> (i32, i32) {
    %c0_i32 = arith.constant 0 : i32
    %c0_i32_0 = arith.constant 0 : i32
    %c0_i32_1 = arith.constant 0 : i32
    return %c0_i32, %c0_i32_0 : i32, i32
  }
  func.func @transform_2(%arg0: i32) -> i32 {
    %c0_i32 = arith.constant 0 : i32
    %c0_i32_0 = arith.constant 0 : i32
    return %c0_i32 : i32
  }
  func.func @transform_3(%arg0: i32) -> (i32, i32) {
    %c0_i32 = arith.constant 0 : i32
    %c0_i32_0 = arith.constant 0 : i32
    return %c0_i32, %arg0 : i32, i32
  }
}

</mosaic_0001>

<llo_original>
// kernel: tpu_custom_call.1
$region0: #{tpu_custom_call.1}
  #allocation0 [shape = 'u32[]', space=smem, size = 0x4, offset = 0x4, fixed_abs, tag = 'smem constant byte address 0x4 - core index']
  #allocation1 [shape = 'u32[144,128]{1,0:T(1,128)}', space=vmem, size = 0x12000, scoped, tag = 'internal scratch']
  %s0 = inlined_call_operand.hbm [shape: f32[3,256], index: 0, kind: input, shape index: {}]
  %s1 = inlined_call_operand.hbm [shape: f32[3,3], index: 1, kind: input, shape index: {}]
  %s2 = inlined_call_operand.vmem [shape: f32[3], index: 2, kind: input, shape index: {}]
  %s3 = inlined_call_operand.hbm [shape: f32[3,256], index: 3, kind: output, shape index: {}]
  %s4 = sld [smem:[#allocation0]]
  $region57: #{tpu_custom_call.1} parent=0
    _
  %s6 = ssub.s32 1, %s4
  %s7 = scalar_select 0, %s6, %s4
  $region1: #{tpu_custom_call.1} parent=0
    #allocation2 [shape = 'u8[4096]{0}', space=vmem, size = 0x1000, scoped, tag = 'input window, operand 0']
    #allocation3 [shape = 's32[2]{0}', space=sflag, size = 0x8, scoped, tag = 'scoped memory for tpu_custom_call.1']
    #allocation4 [shape = 's32[2]{0}', space=sflag, size = 0x8, scoped, tag = 'scoped memory for tpu_custom_call.1']
    #allocation5 [shape = 's32[2]{0}', space=sflag, size = 0x8, scoped, tag = 'scoped memory for tpu_custom_call.1']
    #allocation6 [shape = 's32[2]{0}', space=sflag, size = 0x8, scoped, tag = 'scoped memory for tpu_custom_call.1']
    #allocation7 [shape = 'u8[2048]{0}', space=smem, size = 0x800, scoped, tag = 'input window, operand 1, single buffered']
    #allocation8 [shape = 'u8[512]{0}', space=smem, size = 0x200, scoped, tag = 'input window, operand 2, single buffered']
    #allocation9 [shape = 'u8[4096]{0}', space=vmem, size = 0x1000, scoped, tag = 'output window, operand 0']
    %8 = vsyncpa [#allocation3], 0
    %s9 = scalar_lea.sflag [#allocation3], 1
    %10 = vsyncpa %s9, 0
    %11 = vsyncpa [#allocation5], 0
    %12 = vsyncpa [#allocation6], 0
    %13 = vsyncpa [#allocation4], 0
    %s14 = scalar_lea.sflag [#allocation4], 1
    %15 = vsyncpa %s14, 0
    loop: start=0, step=1, limit=4
    $region2: #{tpu_custom_call.1} parent=1 // loop_pre_header
      _
    $region3: #{tpu_custom_call.1} parent=1 // loop_header
      %s17 = sphi 0, %s21
      %p18 = scmp.ge.s32.totalorder %s17, 4
      %s27 = sphi 0, %s29
      %s30 = sphi 0, %s27
      %s31 = sphi 0, %s30
      %s47 = sphi 0, %s31
      %s51 = sphi 0, %s51
      %s53 = sphi 0, %s51
      %s54 = sphi 0, %s53
      %s68 = sphi 0, %s54
      %s72 = sphi 0, %s72
      %s74 = sphi 0, %s72
      %s75 = sphi 0, %s74
      %s89 = sphi 0, %s75
      %s95 = sphi 0, %s97
      %s98 = sphi 0, %s95
      %s99 = sphi 0, %s98
      %s115 = sphi 0, %s99
    $region4: #{tpu_custom_call.1} parent=1 // loop_header_branch
      %20 = sbr.rel (%p18) target = $region8
    $region5: #{tpu_custom_call.1} parent=1 // loop_body
      %s22 = ssub.s32 %s17, 1
      %s23 = ssub.s32 %s17, 2
      %s24 = sadd.s32 %s17, 1
      %s25 = ssub.s32 %s17, %s24
      %p26 = scmp.eq.s32.totalorder %s25, 0
      %s28 = sadd.s32 %s27, 1
      %s29 = scalar_select %p26, %s27, %s28
      %p32 = pneg %p26
      %p33 = scmp.eq.s32.totalorder %s17, 1
      %p34 = por %p32, %p33
      %p35 = scmp.ne.s32.totalorder %s27, %s30
      %p36 = scmp.eq.s32.totalorder %s17, 0
      %p37 = por %p35, %p36
      %p38 = scmp.ne.s32.totalorder %s27, %s30
      %p39 = scmp.eq.s32.totalorder %s22, 1
      %p40 = por %p38, %p39
      %p41 = scmp.ne.s32.totalorder %s30, %s31
      %p42 = scmp.eq.s32.totalorder %s22, 0
      %p43 = por %p41, %p42
      %p44 = scmp.ne.s32.totalorder %s30, %s31
      %p45 = scmp.eq.s32.totalorder %s23, 1
      %p46 = por %p44, %p45
      %p48 = scmp.ne.s32.totalorder %s31, %s47
      %p49 = scmp.eq.s32.totalorder %s23, 0
      %p50 = por %p48, %p49
      %s52 = sadd.s32 %s51, 1
      %p55 = scmp.eq.s32.totalorder %s17, 1
      %p56 = scmp.ne.s32.totalorder %s51, %s53
      %p57 = scmp.eq.s32.totalorder %s17, 0
      %p58 = por %p56, %p57
      %p59 = scmp.ne.s32.totalorder %s51, %s53
      %p60 = scmp.eq.s32.totalorder %s22, 1
      %p61 = por %p59, %p60
      %p62 = scmp.ne.s32.totalorder %s53, %s54
      %p63 = scmp.eq.s32.totalorder %s22, 0
      %p64 = por %p62, %p63
      %p65 = scmp.ne.s32.totalorder %s53, %s54
      %p66 = scmp.eq.s32.totalorder %s23, 1
      %p67 = por %p65, %p66
      %p69 = scmp.ne.s32.totalorder %s54, %s68
      %p70 = scmp.eq.s32.totalorder %s23, 0
      %p71 = por %p69, %p70
      %s73 = sadd.s32 %s72, 1
      %p76 = scmp.eq.s32.totalorder %s17, 1
      %p77 = scmp.ne.s32.totalorder %s72, %s74
      %p78 = scmp.eq.s32.totalorder %s17, 0
      %p79 = por %p77, %p78
      %p80 = scmp.ne.s32.totalorder %s72, %s74
      %p81 = scmp.eq.s32.totalorder %s22, 1
      %p82 = por %p80, %p81
      %p83 = scmp.ne.s32.totalorder %s74, %s75
      %p84 = scmp.eq.s32.totalorder %s22, 0
      %p85 = por %p83, %p84
      %p86 = scmp.ne.s32.totalorder %s74, %s75
      %p87 = scmp.eq.s32.totalorder %s23, 1
      %p88 = por %p86, %p87
      %p90 = scmp.ne.s32.totalorder %s75, %s89
      %p91 = scmp.eq.s32.totalorder %s23, 0
      %p92 = por %p90, %p91
      %s93 = ssub.s32 %s17, %s24
      %p94 = scmp.eq.s32.totalorder %s93, 0
      %s96 = sadd.s32 %s95, 1
      %s97 = scalar_select %p94, %s95, %s96
      %p100 = pneg %p94
      %p101 = scmp.eq.s32.totalorder %s17, 1
      %p102 = por %p100, %p101
      %p103 = scmp.ne.s32.totalorder %s95, %s98
      %p104 = scmp.eq.s32.totalorder %s17, 0
      %p105 = por %p103, %p104
      %p106 = scmp.ne.s32.totalorder %s95, %s98
      %p107 = scmp.eq.s32.totalorder %s22, 1
      %p108 = por %p106, %p107
      %p109 = scmp.ne.s32.totalorder %s98, %s99
      %p110 = scmp.eq.s32.totalorder %s22, 0
      %p111 = por %p109, %p110
      %p112 = scmp.ne.s32.totalorder %s98, %s99
      %p113 = scmp.eq.s32.totalorder %s23, 1
      %p114 = por %p112, %p113
      %p116 = scmp.ne.s32.totalorder %s99, %s115
      %p117 = scmp.eq.s32.totalorder %s23, 0
      %p118 = por %p116, %p117
      %p119 = scmp.le.s32.totalorder 1, %s17
      %p120 = scmp.lt.s32.totalorder %s17, 3
      %p121 = pnand %p119, %p120
      %p122 = pneg %p121
      // Predicated region
      $region9: #{tpu_custom_call.1} parent=5 // pred_check
        _
      $region10: #{tpu_custom_call.1} parent=5 // pred_check_branch
        %124 = sbr.rel (%p121) target = $region12
      $region11: #{tpu_custom_call.1} parent=5 // pred_region
        %s125 = ssub.s32 %s17, 1
        // Predicated region
        $region13: #{tpu_custom_call.1} parent=11 // pred_check
          %p126 = pneg %p64
        $region14: #{tpu_custom_call.1} parent=11 // pred_check_branch
          %128 = sbr.rel (%p126) target = $region16
        $region15: #{tpu_custom_call.1} parent=11 // pred_region
          %s130 = ssub.s32 64, 64
          %131 = vsyncadd [#allocation5], %s130
          %134 = dma.hbm_to_smem %s1, 64, [#allocation7], [#allocation5]
        $region16: #{tpu_custom_call.1} parent=11 // pred_fallthru
          _
        // Predicated region
        $region17: #{tpu_custom_call.1} parent=11 // pred_check
          %p135 = pneg %p85
        $region18: #{tpu_custom_call.1} parent=11 // pred_check_branch
          %137 = sbr.rel (%p135) target = $region20
        $region19: #{tpu_custom_call.1} parent=11 // pred_region
          %s139 = ssub.s32 16, 16
          %140 = vsyncadd [#allocation6], %s139
          %s142 = sshll.u32 %s2, 4
          %s143 = int_to_ptr.vmem [resolvable:$true] %s142
          %145 = dma.vmem_to_smem %s143, 16, [#allocation8], [#allocation6]
        $region20: #{tpu_custom_call.1} parent=11 // pred_fallthru
          _
      $region12: #{tpu_custom_call.1} parent=5 // pred_fallthru
        _
      %p146 = scmp.lt.s32.totalorder %s17, 2
      // Predicated region
      $region21: #{tpu_custom_call.1} parent=5 // pred_check
        %p147 = pneg %p146
      $region22: #{tpu_custom_call.1} parent=5 // pred_check_branch
        %149 = sbr.rel (%p147) target = $region24
      $region23: #{tpu_custom_call.1} parent=5 // pred_region
        // Predicated region
        $region25: #{tpu_custom_call.1} parent=23 // pred_check
          %p150 = pneg %p37
        $region26: #{tpu_custom_call.1} parent=23 // pred_check_branch
          %152 = sbr.rel (%p150) target = $region28
        $region27: #{tpu_custom_call.1} parent=23 // pred_region
          %s153 = sand.u32 %s27, 1
          %s154 = scalar_lea.sflag [#allocation3], %s153
          %s155 = sand.u32 %s27, 1
          %s156 = smul.addr %s155, 4
          %s157 = scalar_lea.vmem [#allocation2], %s156
          %s159 = ssub.s32 64, 64
          %160 = vsyncadd %s154, %s159
          %s161 = smul.addr %s17, 64
          %s162 = scalar_lea.hbm %s0, %s161
          %s164 = sshll.u32 %s157, 4
          %s165 = int_to_ptr.vmem [resolvable:$true] %s164
          %167 = dma.hbm_to_vmem [thread:$0]  %s162, 64, %s165, %s154
        $region28: #{tpu_custom_call.1} parent=23 // pred_fallthru
          _
      $region24: #{tpu_custom_call.1} parent=5 // pred_fallthru
        _
      %p168 = scmp.le.s32.totalorder 1, %s17
      %p169 = scmp.lt.s32.totalorder %s17, 3
      %p170 = pnand %p168, %p169
      %p171 = pneg %p170
      // Predicated region
      $region29: #{tpu_custom_call.1} parent=5 // pred_check
        _
      $region30: #{tpu_custom_call.1} parent=5 // pred_check_branch
        %173 = sbr.rel (%p170) target = $region32
      $region31: #{tpu_custom_call.1} parent=5 // pred_region
        %s174 = ssub.s32 %s17, 1
        %s175 = sand.u32 %s30, 1
        %s176 = scalar_lea.sflag [#allocation3], %s175
        %s177 = sand.u32 %s30, 1
        %s178 = smul.addr %s177, 4
        %s179 = scalar_lea.vmem [#allocation2], %s178
        // Predicated region
        $region33: #{tpu_custom_call.1} parent=31 // pred_check
          %p180 = pneg %p43
        $region34: #{tpu_custom_call.1} parent=31 // pred_check_branch
          %182 = sbr.rel (%p180) target = $region36
        $region35: #{tpu_custom_call.1} parent=31 // pred_region
          %183 = dma.done %s176, 64
        $region36: #{tpu_custom_call.1} parent=31 // pred_fallthru
          _
        // Predicated region
        $region37: #{tpu_custom_call.1} parent=31 // pred_check
          %p184 = pneg %p64
        $region38: #{tpu_custom_call.1} parent=31 // pred_check_branch
          %186 = sbr.rel (%p184) target = $region40
        $region39: #{tpu_custom_call.1} parent=31 // pred_region
          %187 = dma.done [#allocation5], 64
        $region40: #{tpu_custom_call.1} parent=31 // pred_fallthru
          _
        // Predicated region
        $region41: #{tpu_custom_call.1} parent=31 // pred_check
          %p188 = pneg %p85
        $region42: #{tpu_custom_call.1} parent=31 // pred_check_branch
          %190 = sbr.rel (%p188) target = $region44
        $region43: #{tpu_custom_call.1} parent=31 // pred_region
          %191 = dma.done [#allocation6], 16
        $region44: #{tpu_custom_call.1} parent=31 // pred_fallthru
          _
        %192 = sfence
        %s193 = sand.u32 %s30, 1
        %s194 = scalar_lea.sflag [#allocation3], %s193
        %s195 = sand.u32 %s30, 1
        %s196 = smul.addr %s195, 4
        %s197 = scalar_lea.vmem [#allocation2], %s196
        %p198 = pneg %p43
        %p199 = pneg %p40
        %p200 = pneg %p64
        %p201 = pneg %p61
        %p202 = pneg %p85
        %p203 = pneg %p82
        %p204 = pneg %p111
        %p205 = pneg %p108
        %s206 = sand.u32 %s98, 1
        %s207 = scalar_lea.sflag [#allocation4], %s206
        %s208 = sand.u32 %s98, 1
        %s209 = smul.addr %s208, 4
        %s210 = scalar_lea.vmem [#allocation9], %s209
        %v211 = vld [vmem:[%s179] sm:$0x7]
        %s212 = sld [smem:[#allocation7]]
        %v213 = vstv %s212
        %v214 = vmul.f32 %v211, %v213
        %s215 = sld [smem:[#allocation8]]
        %v216 = vstv %s215
        %v217 = vadd.f32 %v214, %v216
        %s218 = sld [smem:[#allocation7 + $0x1]]
        %v219 = vstv %s218
        %v220 = vmul.f32 %v211, %v219
        %v222 = vrot.slane %v220, 1
        %v224 = vadd.f32 %v217, %v222
        %s225 = sld [smem:[#allocation7 + $0x2]]
        %v226 = vstv %s225
        %v227 = vmul.f32 %v211, %v226
        %v229 = vrot.slane %v227, 2
        %v231 = vadd.f32 %v224, %v229
        %s232 = sld [smem:[#allocation7 + $0x80]]
        %v233 = vstv %s232
        %v234 = vmul.f32 %v211, %v233
        %s235 = sld [smem:[#allocation8 + $0x1]]
        %v236 = vstv %s235
        %v237 = vadd.f32 %v234, %v236
        %s238 = sld [smem:[#allocation7 + $0x81]]
        %v239 = vstv %s238
        %v240 = vmul.f32 %v211, %v239
        %v242 = vrot.slane %v240, 1
        %v244 = vadd.f32 %v237, %v242
        %s245 = sld [smem:[#allocation7 + $0x82]]
        %v246 = vstv %s245
        %v247 = vmul.f32 %v211, %v246
        %v249 = vrot.slane %v247, 2
        %v251 = vadd.f32 %v244, %v249
        %s252 = sld [smem:[#allocation7 + $0x100]]
        %v253 = vstv %s252
        %v254 = vmul.f32 %v211, %v253
        %s255 = sld [smem:[#allocation8 + $0x2]]
        %v256 = vstv %s255
        %v257 = vadd.f32 %v254, %v256
        %s258 = sld [smem:[#allocation7 + $0x101]]
        %v259 = vstv %s258
        %v260 = vmul.f32 %v211, %v259
        %v262 = vrot.slane %v260, 1
        %v264 = vadd.f32 %v257, %v262
        %s265 = sld [smem:[#allocation7 + $0x102]]
        %v266 = vstv %s265
        %v267 = vmul.f32 %v211, %v266
        %v269 = vrot.slane %v267, 2
        %v271 = vadd.f32 %v264, %v269
        %v273 = vrot.slane %v251, 7
        %v276 = vrot.slane %v271, 6
        %vm278 = vcmask 1040384
        %v279 = vsel %vm278, %v231, %v273
        %vm280 = vcmask 1041408
        %v281 = vsel %vm280, %v279, %v276
        %282 = vst [vmem:[%s210] sm:$0x7] %v281
        %s283 = sand.u32 %s98, 1
        %s284 = scalar_lea.sflag [#allocation4], %s283
        %s285 = sand.u32 %s98, 1
        %s286 = smul.addr %s285, 4
        %s287 = scalar_lea.vmem [#allocation9], %s286
        // Predicated region
        $region45: #{tpu_custom_call.1} parent=31 // pred_check
          %p288 = pneg %p108
        $region46: #{tpu_custom_call.1} parent=31 // pred_check_branch
          %290 = sbr.rel (%p288) target = $region48
        $region47: #{tpu_custom_call.1} parent=31 // pred_region
          %s292 = ssub.s32 64, 64
          %293 = vsyncadd %s284, %s292
          %s294 = smul.addr %s22, 64
          %s295 = scalar_lea.hbm %s3, %s294
          %s297 = sshll.u32 %s287, 4
          %s298 = int_to_ptr.vmem [resolvable:$true] %s297
          %300 = dma.vmem_to_hbm [thread:$0]  %s298, 64, %s295, %s284
        $region48: #{tpu_custom_call.1} parent=31 // pred_fallthru
          _
      $region32: #{tpu_custom_call.1} parent=5 // pred_fallthru
        _
      %p301 = scmp.le.s32.totalorder 2, %s17
      // Predicated region
      $region49: #{tpu_custom_call.1} parent=5 // pred_check
        %p302 = pneg %p301
      $region50: #{tpu_custom_call.1} parent=5 // pred_check_branch
        %304 = sbr.rel (%p302) target = $region52
      $region51: #{tpu_custom_call.1} parent=5 // pred_region
        %s305 = ssub.s32 %s17, 2
        // Predicated region
        $region53: #{tpu_custom_call.1} parent=51 // pred_check
          %p306 = pneg %p114
        $region54: #{tpu_custom_call.1} parent=51 // pred_check_branch
          %308 = sbr.rel (%p306) target = $region56
        $region55: #{tpu_custom_call.1} parent=51 // pred_region
          %s309 = sand.u32 %s99, 1
          %s310 = scalar_lea.sflag [#allocation4], %s309
          %s311 = sand.u32 %s99, 1
          %s312 = smul.addr %s311, 4
          %s313 = scalar_lea.vmem [#allocation9], %s312
          %314 = dma.done %s310, 64
        $region56: #{tpu_custom_call.1} parent=51 // pred_fallthru
          _
      $region52: #{tpu_custom_call.1} parent=5 // pred_fallthru
        _
    $region6: #{tpu_custom_call.1} parent=1 // loop_footer
      %s21 = sadd.s32 1, %s17
    $region7: #{tpu_custom_call.1} parent=1 // loop_footer_branch
      %16 = sbr.rel target = $region3
    $region8: #{tpu_custom_call.1} parent=1 // loop_exit
      _
    %315 = vsyncpa [#allocation3], 1
    %s316 = scalar_lea.sflag [#allocation3], 1
    %317 = vsyncpa %s316, 1
    %318 = vsyncpa [#allocation4], 1
    %s319 = scalar_lea.sflag [#allocation4], 1
    %320 = vsyncpa %s319, 1
    %321 = vsyncpa [#allocation5], 1
    %s322 = scalar_lea.sflag [#allocation5], 1
    %323 = vsyncpa %s322, 1
    %324 = vsyncpa [#allocation6], 1
    %s325 = scalar_lea.sflag [#allocation6], 1
    %326 = vsyncpa %s325, 1

</llo_original>
